<compile_context>
chip_gen: v6e
topology: v6e:2x2x1
jax: 0.10.0
libtpu: 0.0.40
codegen_flags: <defaults>
</compile_context>

<pallas_src>
import jax
import jax.numpy as jnp
from jax.experimental import pallas as pl
from jax.experimental.pallas import tpu as pltpu


def _skipcnn_kernel(x_ref,      # VMEM (rb, fan_in)          flattened input rows
                    w_ref,      # VMEM (fan_in, fc_out_p)    BN-folded, transposed weight
                    b_ref,      # VMEM (1, fc_out_p)         BN-folded bias (f32)
                    out_ref):   # VMEM (rb, fc_out_p)
    acc = jnp.dot(x_ref[...], w_ref[...], preferred_element_type=jnp.float32)
    out_ref[...] = (acc + b_ref[...]).astype(out_ref.dtype)


def skipcnn_prepare_params(gamma, beta, running_mean, running_var, w, b,
                           *, eps=1e-5, param_dtype=jnp.float32):
    """One-time host-side parameter prep (run at parameter-load time, not per call).

    Folds eval-mode BatchNorm2d(1) into the Linear layer:
        y = ((x - mu)/sqrt(var+eps)*gamma + beta) @ W^T + b
          =  x @ (scale*W)^T + (b + shift * W.sum(axis=1))
    pre-transposes the weight to (fan_in, fc_out) and lane-pads fc_out to a
    multiple of 128 so the kernel's output stores are lane-dense.
    Returns (wt, b2, fc_out).
    """
    # PyTorch BatchNorm2d(1) params/stats have shape (1,); make them true scalars.
    gamma = jnp.reshape(jnp.asarray(gamma, jnp.float32), ())
    beta = jnp.reshape(jnp.asarray(beta, jnp.float32), ())
    mu = jnp.reshape(jnp.asarray(running_mean, jnp.float32), ())
    var = jnp.reshape(jnp.asarray(running_var, jnp.float32), ())

    scale = gamma / jnp.sqrt(var + eps)
    shift = beta - mu * scale

    w = jnp.asarray(w, jnp.float32)                       # (fc_out, fan_in)
    b = jnp.asarray(b, jnp.float32)                       # (fc_out,)
    fc_out = w.shape[0]

    wt = (scale * w).T                                    # (fan_in, fc_out)
    b2 = b + shift * jnp.sum(w, axis=1)                   # (fc_out,)

    # Pad the output dimension up to a multiple of 128 lanes (unmasked vst).
    pad = (-fc_out) % 128
    if pad:
        wt = jnp.pad(wt, ((0, 0), (0, pad)))
        b2 = jnp.pad(b2, (0, pad))

    return wt.astype(param_dtype), b2.reshape(1, -1).astype(jnp.float32), fc_out


def _choose_row_block(n, fan_in, fc_out_p, itemsize, row_block):
    """Pick a large, 256-aligned row block that fits comfortably in scoped VMEM."""
    per_row = (fan_in + fc_out_p) * itemsize
    rb_cap = max(256, (40 * 1024 * 1024) // (2 * per_row))   # double-buffered slabs
    rb = min(row_block, rb_cap)
    if n <= rb:
        # Split 2-way (v7x has 2 TensorCores) only when each half is still a big
        # (>= 1 MiB) DMA slab; otherwise one full-extent block is best on 1-TC chips.
        half = -(-n // 2)
        if half * fan_in * itemsize >= (1 << 20):
            return min(n, ((half + 255) // 256) * 256)
        return n                          # single full-extent block, one grid step
    return max(256, (rb // 256) * 256)


def skipcnn_forward(x, wt, b2, fc_out, *, row_block=4096):
    """SkipCNN forward with BN-folded params from skipcnn_prepare_params.

    x  : (N, 1, cnn_seg_length, ms_n_mels)  (f32 or bf16; output dtype follows x)
    wt : (fan_in, fc_out_padded)            folded, transposed, lane-padded weight
    b2 : (1, fc_out_padded)                 folded bias (f32)
    """
    n = x.shape[0]
    fan_in = x.shape[1] * x.shape[2] * x.shape[3]
    fc_out_p = wt.shape[1]
    assert wt.shape[0] == fan_in

    x2 = x.reshape(n, fan_in)                            # == x.view(-1, fan_in)
    rb = _choose_row_block(n, fan_in, fc_out_p, x2.dtype.itemsize, row_block)
    grid = (pl.cdiv(n, rb),)                             # ragged tail masked by Pallas

    vmem_need = (2 * rb * (fan_in + fc_out_p) * x2.dtype.itemsize
                 + 2 * (fan_in + 1) * fc_out_p * 4)
    vmem_limit = int(min(64 * 1024 * 1024,
                         max(32 * 1024 * 1024, vmem_need * 5 // 4)))

    grid_spec = pltpu.PrefetchScalarGridSpec(
        num_scalar_prefetch=0,
        grid=grid,
        in_specs=[
            pl.BlockSpec((rb, fan_in), lambda i: (i, 0)),        # activations
            # Grid-invariant blocks (constant block index) are not re-DMA'd per step.
            pl.BlockSpec((fan_in, fc_out_p), lambda i: (0, 0)),  # folded weight
            pl.BlockSpec((1, fc_out_p), lambda i: (0, 0)),       # folded bias
        ],
        out_specs=pl.BlockSpec((rb, fc_out_p), lambda i: (i, 0)),
    )

    out = pl.pallas_call(
        _skipcnn_kernel,
        out_shape=jax.ShapeDtypeStruct((n, fc_out_p), x.dtype),
        grid_spec=grid_spec,
        compiler_params=pltpu.CompilerParams(
            dimension_semantics=("parallel",),
            vmem_limit_bytes=vmem_limit),
    )(x2, wt, b2)

    # TODO(synk): fc_out_h=None (nn.Identity) and training-mode BatchNorm (batch
    # statistics + running-stat update) are not covered by this fused kernel.

    # Slice only when fc_out was lane-padded (no-op / elided otherwise).
    return out if fc_out_p == fc_out else out[:, :fc_out]


def skipcnn_reference(x, gamma, beta, running_mean, running_var, w, b, eps=1e-5):
    """Pure-JAX reference mirroring the PyTorch forward (eval-mode BN)."""
    gamma = jnp.reshape(gamma, ())
    beta = jnp.reshape(beta, ())
    mu = jnp.reshape(running_mean, ())
    var = jnp.reshape(running_var, ())
    xn = (x - mu) / jnp.sqrt(var + eps) * gamma + beta
    xf = xn.reshape(x.shape[0], -1)
    return xf @ w.T + b


if __name__ == "__main__":
    key = jax.random.PRNGKey(0)
    k1, k2, k3, k4, k5, k6, k7 = jax.random.split(key, 7)

    # Small shapes consistent with the module: N = batch*n_wins windows,
    # 1 channel, (cnn_seg_length x ms_n_mels) mel patch, fc_out_h hidden size.
    N, C = 16, 1
    cnn_seg_length, ms_n_mels = 8, 16        # fan_in = 128
    fc_out_h = 128                           # already lane-dense

    x = jax.random.normal(k1, (N, C, cnn_seg_length, ms_n_mels), dtype=jnp.float32)
    # PyTorch BatchNorm2d(1) params/stats have shape (1,).
    gamma = 1.0 + 0.1 * jax.random.normal(k2, (1,), dtype=jnp.float32)
    beta = 0.1 * jax.random.normal(k3, (1,), dtype=jnp.float32)
    running_mean = 0.1 * jax.random.normal(k4, (1,), dtype=jnp.float32)
    running_var = 1.0 + 0.1 * jnp.abs(jax.random.normal(k5, (1,), dtype=jnp.float32))
    w = 0.05 * jax.random.normal(k6, (fc_out_h, cnn_seg_length * ms_n_mels),
                                 dtype=jnp.float32)
    b = 0.01 * jax.random.normal(k7, (fc_out_h,), dtype=jnp.float32)

    # One-time host-side fold (BN -> Linear), then the fused kernel forward.
    wt, b2, fc_out = skipcnn_prepare_params(gamma, beta, running_mean,
                                            running_var, w, b)
    out = skipcnn_forward(x, wt, b2, fc_out)
    out = jax.block_until_ready(out)

    ref = skipcnn_reference(x, gamma, beta, running_mean, running_var, w, b)
    assert out.shape == (N, fc_out_h), out.shape
    assert jnp.allclose(out, ref, rtol=2e-2, atol=2e-2), "mismatch vs reference"

    print("KERNEL_OK")
</pallas_src>

<mosaic_0001>
module attributes {stable_mosaic.version = 11 : i64} {
  func.func @_skipcnn_kernel(%arg0: i32, %arg1: memref<16x128xf32, #tpu.memory_space<vmem>>, %arg2: memref<128x128xf32, #tpu.memory_space<vmem>>, %arg3: memref<1x128xf32, #tpu.memory_space<vmem>>, %arg4: memref<16x128xf32, #tpu.memory_space<vmem>>) attributes {dimension_semantics = [#tpu.dimension_semantics<parallel>], iteration_bounds = array<i64: 1>, scalar_prefetch = 0 : i64, scratch_operands = 0 : i64, tpu.core_type = #tpu.core_type<tc>, window_params = [{transform_indices = @transform_0, window_bounds = array<i64: 16, 128>}, {pipeline_mode = #tpu.pipeline_mode<synchronous>, transform_indices = @transform_1, window_bounds = array<i64: 128, 128>}, {pipeline_mode = #tpu.pipeline_mode<synchronous>, transform_indices = @transform_2, window_bounds = array<i64: 1, 128>}, {transform_indices = @transform_3, window_bounds = array<i64: 16, 128>}]} {
    %c0 = arith.constant 0 : index
    %c0_0 = arith.constant 0 : index
    %0 = vector.load %arg1[%c0, %c0_0] : memref<16x128xf32, #tpu.memory_space<vmem>>, vector<16x128xf32>
    %c0_1 = arith.constant 0 : index
    %c0_2 = arith.constant 0 : index
    %1 = vector.load %arg2[%c0_1, %c0_2] : memref<128x128xf32, #tpu.memory_space<vmem>>, vector<128x128xf32>
    %cst = arith.constant dense<0.000000e+00> : vector<16x128xf32>
    %2 = tpu.matmul %0, %1, %cst {dimension_numbers = #tpu.dot_dimension_numbers<[1], [0], [0], [1], [0, 0, 1, 1], [], []>} : vector<16x128xf32>, vector<128x128xf32>, vector<16x128xf32> -> vector<16x128xf32>
    %c0_3 = arith.constant 0 : index
    %c0_4 = arith.constant 0 : index
    %3 = vector.load %arg3[%c0_3, %c0_4] : memref<1x128xf32, #tpu.memory_space<vmem>>, vector<1x128xf32>
    %4 = vector.broadcast %3 : vector<1x128xf32> to vector<16x128xf32>
    %5 = arith.addf %2, %4 : vector<16x128xf32>
    %c0_5 = arith.constant 0 : index
    %c0_6 = arith.constant 0 : index
    %6 = vector.load %arg4[%c0_5, %c0_6] : memref<16x128xf32, #tpu.memory_space<vmem>>, vector<16x128xf32>
    tpu.vector_store %arg4[%c0_5, %c0_6], %5 {strides = array<i32>} : memref<16x128xf32, #tpu.memory_space<vmem>>, vector<16x128xf32>,
    return
  }
  func.func @transform_0(%arg0: i32) -> (i32, i32) {
    %c0_i32 = arith.constant 0 : i32
    %c0_i32_0 = arith.constant 0 : i32
    return %arg0, %c0_i32 : i32, i32
  }
  func.func @transform_1(%arg0: i32) -> (i32, i32) {
    %c0_i32 = arith.constant 0 : i32
    %c0_i32_0 = arith.constant 0 : i32
    %c0_i32_1 = arith.constant 0 : i32
    return %c0_i32, %c0_i32_0 : i32, i32
  }
  func.func @transform_2(%arg0: i32) -> (i32, i32) {
    %c0_i32 = arith.constant 0 : i32
    %c0_i32_0 = arith.constant 0 : i32
    %c0_i32_1 = arith.constant 0 : i32
    return %c0_i32, %c0_i32_0 : i32, i32
  }
  func.func @transform_3(%arg0: i32) -> (i32, i32) {
    %c0_i32 = arith.constant 0 : i32
    %c0_i32_0 = arith.constant 0 : i32
    return %arg0, %c0_i32 : i32, i32
  }
}

</mosaic_0001>

<llo_original>
// kernel: tpu_custom_call.1
$region0: #{tpu_custom_call.1}
  #allocation0 [shape = 'u32[]', space=smem, size = 0x4, offset = 0x4, fixed_abs, tag = 'smem constant byte address 0x4 - core index']
  #allocation1 [shape = 'u32[144,128]{1,0:T(1,128)}', space=vmem, size = 0x12000, scoped, tag = 'internal scratch']
  %s0 = inlined_call_operand.hbm [shape: f32[16,128], index: 0, kind: input, shape index: {}]
  %s1 = inlined_call_operand.hbm [shape: f32[128,128], index: 1, kind: input, shape index: {}]
  %s2 = inlined_call_operand.vmem [shape: f32[1,128], index: 2, kind: input, shape index: {}]
  %s3 = inlined_call_operand.hbm [shape: f32[16,128], index: 3, kind: output, shape index: {}]
  %s4 = sld [smem:[#allocation0]]
  $region30: #{tpu_custom_call.1} parent=0
    _
  %s6 = ssub.s32 1, %s4
  %s7 = scalar_select 0, %s6, %s4
  $region1: #{tpu_custom_call.1} parent=0
    #allocation2 [shape = 'u8[8192]{0}', space=vmem, size = 0x2000, scoped, tag = 'input window, operand 0, single buffered']
    #allocation3 [shape = 's32[1]{0}', space=sflag, size = 0x4, scoped, tag = 'scoped memory for tpu_custom_call.1']
    #allocation4 [shape = 's32[1]{0}', space=sflag, size = 0x4, scoped, tag = 'scoped memory for tpu_custom_call.1']
    #allocation5 [shape = 'u8[65536]{0}', space=vmem, size = 0x10000, scoped, tag = 'input window, operand 1, single buffered']
    #allocation6 [shape = 's32[1]{0}', space=sflag, size = 0x4, scoped, tag = 'scoped memory for tpu_custom_call.1']
    #allocation7 [shape = 'u8[8192]{0}', space=vmem, size = 0x2000, scoped, tag = 'output window, operand 0, single buffered']
    %8 = vsyncpa [#allocation3], 0
    %9 = vsyncpa [#allocation6], 0
    %10 = vsyncpa [#allocation4], 0
    // Predicated region
    $region2: #{tpu_custom_call.1} parent=1 // pred_check
      _
    $region3: #{tpu_custom_call.1} parent=1 // pred_check_branch
      %12 = sbr.rel (0) target = $region5
    $region4: #{tpu_custom_call.1} parent=1 // pred_region
      %s14 = ssub.s32 256, 256
      %15 = vsyncadd [#allocation3], %s14
      %s16 = sshll.u32 [#allocation2], 4
      %s17 = int_to_ptr.vmem [resolvable:$true] %s16
      %22 = dma.hbm_to_vmem [thread:$0]  %s0, 256, %s17, [#allocation3], 128, 128, 8
    $region5: #{tpu_custom_call.1} parent=1 // pred_fallthru
      _
    // Predicated region
    $region6: #{tpu_custom_call.1} parent=1 // pred_check
      _
    $region7: #{tpu_custom_call.1} parent=1 // pred_check_branch
      %24 = sbr.rel (0) target = $region9
    $region8: #{tpu_custom_call.1} parent=1 // pred_region
      %s26 = ssub.s32 2048, 2048
      %27 = vsyncadd [#allocation6], %s26
      %s28 = sshll.u32 [#allocation5], 4
      %s29 = int_to_ptr.vmem [resolvable:$true] %s28
      %34 = dma.hbm_to_vmem [thread:$0]  %s1, 2048, %s29, [#allocation6], 128, 128, 8
    $region9: #{tpu_custom_call.1} parent=1 // pred_fallthru
      _
    // Predicated region
    $region10: #{tpu_custom_call.1} parent=1 // pred_check
      _
    $region11: #{tpu_custom_call.1} parent=1 // pred_check_branch
      %36 = sbr.rel (0) target = $region13
    $region12: #{tpu_custom_call.1} parent=1 // pred_region
      _
    $region13: #{tpu_custom_call.1} parent=1 // pred_fallthru
      _
    // Predicated region
    $region14: #{tpu_custom_call.1} parent=1 // pred_check
      _
    $region15: #{tpu_custom_call.1} parent=1 // pred_check_branch
      %38 = sbr.rel (0) target = $region17
    $region16: #{tpu_custom_call.1} parent=1 // pred_region
      %39 = dma.done [#allocation3], 256
    $region17: #{tpu_custom_call.1} parent=1 // pred_fallthru
      _
    // Predicated region
    $region18: #{tpu_custom_call.1} parent=1 // pred_check
      _
    $region19: #{tpu_custom_call.1} parent=1 // pred_check_branch
      %41 = sbr.rel (0) target = $region21
    $region20: #{tpu_custom_call.1} parent=1 // pred_region
      %42 = dma.done [#allocation6], 2048
    $region21: #{tpu_custom_call.1} parent=1 // pred_fallthru
      _
    %v43 = vld [vmem:[#allocation2] sm:$0xff]
    %v44 = vld [vmem:[#allocation2 + $0x8] sm:$0xff]
    %v45 = vld [vmem:[#allocation5] sm:$0xff]
    %v46 = vld [vmem:[#allocation5 + $0x8] sm:$0xff]
    %v47 = vld [vmem:[#allocation5 + $0x10] sm:$0xff]
    %v48 = vld [vmem:[#allocation5 + $0x18] sm:$0xff]
    %v49 = vld [vmem:[#allocation5 + $0x20] sm:$0xff]
    %v50 = vld [vmem:[#allocation5 + $0x28] sm:$0xff]
    %v51 = vld [vmem:[#allocation5 + $0x30] sm:$0xff]
    %v52 = vld [vmem:[#allocation5 + $0x38] sm:$0xff]
    %v53 = vld [vmem:[#allocation5 + $0x40] sm:$0xff]
    %v54 = vld [vmem:[#allocation5 + $0x48] sm:$0xff]
    %v55 = vld [vmem:[#allocation5 + $0x50] sm:$0xff]
    %v56 = vld [vmem:[#allocation5 + $0x58] sm:$0xff]
    %v57 = vld [vmem:[#allocation5 + $0x60] sm:$0xff]
    %v58 = vld [vmem:[#allocation5 + $0x68] sm:$0xff]
    %v59 = vld [vmem:[#allocation5 + $0x70] sm:$0xff]
    %v60 = vld [vmem:[#allocation5 + $0x78] sm:$0xff]
    %v61 = vld [vmem:[%s2] sm:$0x1]
    %v63 = vlaneseq
    %v64 = vshrl.u32 %v63, 7
    %v65 = vsub.s32 0, %v64
    %v66 = vrot.slane %v61, %v65
    %68 = vmatprep.subr.mxu0 0.0
    %69 = vmatpush1.msra.mxu0 %v60
    %70 = vmatprep.subr.mxu0 0.0
    %71 = vmatpush1.msra.mxu0 %v59
    %72 = vmatprep.subr.mxu0 0.0
    %73 = vmatpush1.msra.mxu0 %v58
    %74 = vmatprep.subr.mxu0 0.0
    %75 = vmatpush1.msra.mxu0 %v57
    %76 = vmatprep.subr.mxu0 0.0
    %77 = vmatpush1.msra.mxu0 %v56
    %78 = vmatprep.subr.mxu0 0.0
    %79 = vmatpush1.msra.mxu0 %v55
    %80 = vmatprep.subr.mxu0 0.0
    %81 = vmatpush1.msra.mxu0 %v54
    %82 = vmatprep.subr.mxu0 0.0
    %83 = vmatpush1.msra.mxu0 %v53
    %84 = vmatprep.subr.mxu0 0.0
    %85 = vmatpush1.msra.mxu0 %v52
    %86 = vmatprep.subr.mxu0 0.0
    %87 = vmatpush1.msra.mxu0 %v51
    %88 = vmatprep.subr.mxu0 0.0
    %89 = vmatpush1.msra.mxu0 %v50
    %90 = vmatprep.subr.mxu0 0.0
    %91 = vmatpush1.msra.mxu0 %v49
    %92 = vmatprep.subr.mxu0 0.0
    %93 = vmatpush1.msra.mxu0 %v48
    %94 = vmatprep.subr.mxu0 0.0
    %95 = vmatpush1.msra.mxu0 %v47
    %96 = vmatprep.subr.mxu0 0.0
    %97 = vmatpush1.msra.mxu0 %v46
    %98 = vmatprep.subr.mxu0 0.0
    %99 = vmatpush1.msra.mxu0 %v45
    %100 = vmatprep.subr.mxu0 0.0
    %101 = vmatpush2.msra.mxu0 0.0
    %102 = vmatprep.subr.mxu0 0.0
    %103 = vmatpush2.msra.mxu0 0.0
    %104 = vmatprep.subr.mxu0 0.0
    %105 = vmatpush2.msra.mxu0 0.0
    %106 = vmatprep.subr.mxu0 0.0
    %107 = vmatpush2.msra.mxu0 0.0
    %108 = vmatprep.subr.mxu0 0.0
    %109 = vmatpush2.msra.mxu0 0.0
    %110 = vmatprep.subr.mxu0 0.0
    %111 = vmatpush2.msra.mxu0 0.0
    %112 = vmatprep.subr.mxu0 0.0
    %113 = vmatpush2.msra.mxu0 0.0
    %114 = vmatprep.subr.mxu0 0.0
    %115 = vmatpush2.msra.mxu0 0.0
    %116 = vmatprep.subr.mxu0 0.0
    %117 = vmatpush2.msra.mxu0 0.0
    %118 = vmatprep.subr.mxu0 0.0
    %119 = vmatpush2.msra.mxu0 0.0
    %120 = vmatprep.subr.mxu0 0.0
    %121 = vmatpush2.msra.mxu0 0.0
    %122 = vmatprep.subr.mxu0 0.0
    %123 = vmatpush2.msra.mxu0 0.0
    %124 = vmatprep.subr.mxu0 0.0
    %125 = vmatpush2.msra.mxu0 0.0
    %126 = vmatprep.subr.mxu0 0.0
    %127 = vmatpush2.msra.mxu0 0.0
    %128 = vmatprep.subr.mxu0 0.0
    %129 = vmatpush2.msra.mxu0 0.0
    %130 = vmatprep.subr.mxu0 0.0
    %131 = vmatpush2.msra.mxu0 0.0
    %132 = vmatprep.mubr.f32.mxu0 0.0
    %133 = vmatmul.mubr.f32.gmra.mxu0 %v43
    %v134 = vpop.f32.mrf.mxu0
    %v135 = vadd.f32 %v66, %v134
    %v136 = vpop.f32.mrf.mxu0
    %137 = vmatprep.mubr.f32.mxu0 0.0
    %138 = vmatmul.mubr.f32.gmra.mxu0 %v44
    %v139 = vpop.f32.mrf.mxu0
    %v140 = vadd.f32 %v66, %v139
    %v141 = vpop.f32.mrf.mxu0
    %142 = vdwg.mxu0
    %143 = vst [vmem:[#allocation7] sm:$0xff] %v135
    %144 = vst [vmem:[#allocation7 + $0x8] sm:$0xff] %v140
    // Predicated region
    $region22: #{tpu_custom_call.1} parent=1 // pred_check
      _
    $region23: #{tpu_custom_call.1} parent=1 // pred_check_branch
      %146 = sbr.rel (0) target = $region25
    $region24: #{tpu_custom_call.1} parent=1 // pred_region
      %s148 = ssub.s32 256, 256
      %149 = vsyncadd [#allocation4], %s148
      %s150 = sshll.u32 [#allocation7], 4
      %s151 = int_to_ptr.vmem [resolvable:$true] %s150
      %156 = dma.vmem_to_hbm [thread:$0]  %s151, 256, %s3, [#allocation4], 128, 128, 8
    $region25: #{tpu_custom_call.1} parent=1 // pred_fallthru
      _
    // Predicated region
    $region26: #{tpu_custom_call.1} parent=1 // pred_check
      _
    $region27: #{tpu_custom_call.1} parent=1 // pred_check_branch
      %158 = sbr.rel (0) target = $region29
    $region28: #{tpu_custom_call.1} parent=1 // pred_region
      %159 = dma.done [#allocation4], 256
    $region29: #{tpu_custom_call.1} parent=1 // pred_fallthru
      _
    %160 = vsyncpa [#allocation3], 1
    %161 = vsyncpa [#allocation6], 1
    %162 = vsyncpa [#allocation4], 1

</llo_original>
